<compile_context>
chip_gen: v7x
topology: tpu7x:2x2x1
jax: 0.10.0
libtpu: 0.0.40
codegen_flags: <defaults>
</compile_context>

<pallas_src>
import jax
import jax.numpy as jnp
import numpy as np
from jax.experimental import pallas as pl
from jax.experimental.pallas import tpu as pltpu

# ---------------- model hyper-parameters (small, consistent with the module) ----
VOCAB_SIZE = 20
EMBED_DIM = 32          # embedding_dim
N_FILTERS = 8           # n_filters
FILTER_SIZES = (3, 4, 5)
OUTPUT_DIM = 4
SEQ_LEN = 16
BATCH = 2

FS_MAX = max(FILTER_SIZES)
NF_TOTAL = len(FILTER_SIZES) * N_FILTERS   # 24
NF_PAD = 128                               # lane-pad the merged filter axis
O_PAD = 128                                # lane-pad the logits axis


def _round_up(x, m):
    return (x + m - 1) // m * m


def textcnn_kernel(x_ref, w_ref, b_ref, mask_ref, wfc_ref, bfc_ref, out_ref):
    """Whole batch in one invocation (no grid).

    x_ref    : (X_ROWS, E)         f32  batch-flattened, zero-padded embeddings
    w_ref    : (FS_MAX, E, NF_PAD) bf16 merged conv weights (groups zero-padded to FS_MAX rows)
    b_ref    : (1, NF_PAD)         f32  merged conv bias
    mask_ref : (B*S_PAD, NF_PAD)   f32  1.0 at valid (batch, time, filter-group) positions
    wfc_ref  : (NF_PAD, O_PAD)     bf16 fc weight (transposed + zero-padded)
    bfc_ref  : (1, O_PAD)          f32  fc bias
    out_ref  : (B, O_PAD)          f32  lane-dense logits slab
    """
    n_rows = mask_ref.shape[0]          # B * S_PAD
    batch = out_ref.shape[0]
    s_pad = n_rows // batch
    fs_max = w_ref.shape[0]

    x = x_ref[...]                      # (X_ROWS, E) f32

    # Conv over the merged groups: FS_MAX shift-accumulate MXU matmuls,
    # (B*S_PAD, E) @ (E, NF_PAD) each, bf16 operands / f32 accumulation.
    acc = jnp.zeros((n_rows, w_ref.shape[2]), jnp.float32)
    for j in range(fs_max):             # static, unrolled
        xj = x[j:j + n_rows, :].astype(jnp.bfloat16)
        acc = acc + jnp.dot(xj, w_ref[j], preferred_element_type=jnp.float32)

    # bias + ReLU; zero out rows past each group's valid conv length (and the
    # sequence/batch padding rows) so they cannot win the max.
    act = jnp.maximum(acc + b_ref[...], 0.0) * mask_ref[...]

    # max-over-time pooling per batch element (valid ReLU outputs are >= 0,
    # so the zeroed invalid rows never exceed the true maximum).
    pooled = jnp.concatenate(
        [jnp.max(act[b * s_pad:(b + 1) * s_pad, :], axis=0, keepdims=True)
         for b in range(batch)], axis=0)                           # (B, NF_PAD)

    # fused final Linear on the lane-padded pooled features.
    logits = jnp.dot(pooled.astype(wfc_ref.dtype), wfc_ref[...],
                     preferred_element_type=jnp.float32) + bfc_ref[...]
    out_ref[...] = logits.astype(out_ref.dtype)


def textcnn_forward(sentence, emb_table, conv_ws, conv_bs, fc_w, fc_b):
    """sentence: (S, B) int32 token ids (PyTorch seq-major convention).

    Returns logits (B, OUTPUT_DIM) float32.
    """
    S, B = sentence.shape
    E = emb_table.shape[1]
    O = fc_b.shape[0]

    # Per-sentence padded length: big enough that every valid conv window of the
    # widest (zero-padded) kernel stays inside its own sentence's (zero-padded) rows.
    s_pad = _round_up(S + FS_MAX - 1, 8)                 # 24 for S=16
    x_rows = _round_up(B * s_pad + FS_MAX - 1, 8)        # 56 for B=2

    # --- embedding lookup + activation layout (plain JAX glue) ----------------
    emb = emb_table[sentence.T]                          # (B, S, E) f32
    emb = jnp.pad(emb, ((0, 0), (0, s_pad - S), (0, 0)))
    x_flat = emb.reshape(B * s_pad, E)
    x_flat = jnp.pad(x_flat, ((0, x_rows - B * s_pad), (0, 0))).astype(jnp.float32)

    # --- merge the conv groups into one (FS_MAX, E, NF_PAD) weight tensor -----
    parts = []
    for fs, w in zip(FILTER_SIZES, conv_ws):
        wt = jnp.transpose(w[:, 0], (1, 2, 0))           # (fs, E, nf)
        parts.append(jnp.pad(wt, ((0, FS_MAX - fs), (0, 0), (0, 0))))
    w_merged = jnp.concatenate(parts, axis=2)            # (FS_MAX, E, NF_TOTAL)
    w_merged = jnp.pad(w_merged, ((0, 0), (0, 0), (0, NF_PAD - NF_TOTAL)))
    w_merged = w_merged.astype(jnp.bfloat16)

    b_merged = jnp.concatenate([b.reshape(-1) for b in conv_bs]).reshape(1, -1)
    b_merged = jnp.pad(b_merged, ((0, 0), (0, NF_PAD - NF_TOTAL))).astype(jnp.float32)

    # validity mask: row r = b*s_pad + t is valid for group g iff t < S - fs_g + 1
    mask_np = np.zeros((B * s_pad, NF_PAD), np.float32)
    for g, fs in enumerate(FILTER_SIZES):
        L = S - fs + 1
        for b in range(B):
            mask_np[b * s_pad:b * s_pad + L, g * N_FILTERS:(g + 1) * N_FILTERS] = 1.0
    mask = jnp.asarray(mask_np)

    # --- fc params, lane-padded ------------------------------------------------
    wfc = jnp.pad(fc_w.T, ((0, NF_PAD - NF_TOTAL), (0, O_PAD - O))).astype(jnp.bfloat16)
    bfc = jnp.pad(fc_b.reshape(1, -1), ((0, 0), (0, O_PAD - O))).astype(jnp.float32)

    vmem = pl.BlockSpec(memory_space=pltpu.MemorySpace.VMEM)
    out_pad = pl.pallas_call(
        textcnn_kernel,
        out_shape=jax.ShapeDtypeStruct((B, O_PAD), jnp.float32),
        in_specs=[vmem] * 6,
        out_specs=vmem,
    )(x_flat, w_merged, b_merged, mask, wfc, bfc)

    return out_pad[:, :O]


def reference_forward(sentence, emb_table, conv_ws, conv_bs, fc_w, fc_b):
    """Pure-JAX float32 reference mirroring the PyTorch forward (eval mode)."""
    x = emb_table[sentence.T]                            # (B, S, E)
    B, S, E = x.shape
    pooled_all = []
    for W, bb in zip(conv_ws, conv_bs):                  # W: (nf, 1, fs, E)
        nf, _, fs, _ = W.shape
        L = S - fs + 1
        cols = []
        for t in range(L):
            window = x[:, t:t + fs, :]                   # (B, fs, E)
            cols.append(jnp.einsum('bfe,nfe->bn', window, W[:, 0]) + bb)
        conv = jnp.stack(cols, axis=2)                   # (B, nf, L)
        conv = jnp.maximum(conv, 0.0)
        pooled_all.append(jnp.max(conv, axis=2))         # (B, nf)
    cat = jnp.concatenate(pooled_all, axis=1)
    return cat @ fc_w.T + fc_b


if __name__ == "__main__":
    key = jax.random.PRNGKey(0)
    keys = jax.random.split(key, 16)

    # Deterministic synthetic parameters (shapes per nn.Module __init__).
    emb_table = jax.random.normal(keys[0], (VOCAB_SIZE, EMBED_DIM), jnp.float32) * 0.1
    conv_ws, conv_bs = [], []
    for i, fs in enumerate(FILTER_SIZES):
        conv_ws.append(jax.random.normal(
            keys[1 + 2 * i], (N_FILTERS, 1, fs, EMBED_DIM), jnp.float32) * 0.1)
        conv_bs.append(jax.random.normal(
            keys[2 + 2 * i], (N_FILTERS,), jnp.float32) * 0.1)
    fc_w = jax.random.normal(
        keys[10], (OUTPUT_DIM, NF_TOTAL), jnp.float32) * 0.1
    fc_b = jax.random.normal(keys[11], (OUTPUT_DIM,), jnp.float32) * 0.1

    # Example input: (seq_len, batch) int32 token ids, as in the PyTorch module.
    sentence = jax.random.randint(keys[12], (SEQ_LEN, BATCH), 0, VOCAB_SIZE, jnp.int32)

    out = textcnn_forward(sentence, emb_table, conv_ws, conv_bs, fc_w, fc_b)
    out = jax.block_until_ready(out)

    ref = reference_forward(sentence, emb_table, conv_ws, conv_bs, fc_w, fc_b)
    # Tolerance loosened vs. the pure-f32 version: the kernel uses bf16 MXU operands
    # (f32 accumulation), the reference is full f32.
    np.testing.assert_allclose(np.asarray(out), np.asarray(ref), rtol=2e-2, atol=2e-2)

    print("KERNEL_OK")
</pallas_src>

<mosaic_0001>
module attributes {stable_mosaic.version = 11 : i64} {
  func.func @textcnn_kernel(%arg0: memref<56x32xf32, #tpu.memory_space<vmem>>, %arg1: memref<5x32x128xbf16, #tpu.memory_space<vmem>>, %arg2: memref<1x128xf32, #tpu.memory_space<vmem>>, %arg3: memref<48x128xf32, #tpu.memory_space<vmem>>, %arg4: memref<128x128xbf16, #tpu.memory_space<vmem>>, %arg5: memref<1x128xf32, #tpu.memory_space<vmem>>, %arg6: memref<2x128xf32, #tpu.memory_space<vmem>>) attributes {dimension_semantics = [], scalar_prefetch = 0 : i64, scratch_operands = 0 : i64, tpu.core_type = #tpu.core_type<tc>} {
    %c0 = arith.constant 0 : index
    %c0_0 = arith.constant 0 : index
    %0 = vector.load %arg0[%c0, %c0_0] : memref<56x32xf32, #tpu.memory_space<vmem>>, vector<56x32xf32>
    %cst = arith.constant 0.000000e+00 : f32
    %1 = vector.broadcast %cst : f32 to vector<48x128xf32>
    %2 = vector.extract_strided_slice %0 {offsets = [0, 0], sizes = [48, 32], strides = [1, 1]} : vector<56x32xf32> to vector<48x32xf32>
    %3 = arith.truncf %2 : vector<48x32xf32> to vector<48x32xbf16>
    %c0_1 = arith.constant 0 : index
    %c0_2 = arith.constant 0 : index
    %c0_3 = arith.constant 0 : index
    %4 = vector.load %arg1[%c0_1, %c0_2, %c0_3] : memref<5x32x128xbf16, #tpu.memory_space<vmem>>, vector<1x32x128xbf16>
    %5 = vector.shape_cast %4 : vector<1x32x128xbf16> to vector<32x128xbf16>
    %cst_4 = arith.constant dense<0.000000e+00> : vector<48x128xf32>
    %6 = tpu.matmul %3, %5, %cst_4 {dimension_numbers = #tpu.dot_dimension_numbers<[1], [0], [0], [1], [0, 0, 1, 1], [], []>} : vector<48x32xbf16>, vector<32x128xbf16>, vector<48x128xf32> -> vector<48x128xf32>
    %7 = arith.addf %1, %6 : vector<48x128xf32>
    %8 = vector.extract_strided_slice %0 {offsets = [1, 0], sizes = [48, 32], strides = [1, 1]} : vector<56x32xf32> to vector<48x32xf32>
    %9 = arith.truncf %8 : vector<48x32xf32> to vector<48x32xbf16>
    %c1 = arith.constant 1 : index
    %c0_5 = arith.constant 0 : index
    %c0_6 = arith.constant 0 : index
    %10 = vector.load %arg1[%c1, %c0_5, %c0_6] : memref<5x32x128xbf16, #tpu.memory_space<vmem>>, vector<1x32x128xbf16>
    %11 = vector.shape_cast %10 : vector<1x32x128xbf16> to vector<32x128xbf16>
    %cst_7 = arith.constant dense<0.000000e+00> : vector<48x128xf32>
    %12 = tpu.matmul %9, %11, %cst_7 {dimension_numbers = #tpu.dot_dimension_numbers<[1], [0], [0], [1], [0, 0, 1, 1], [], []>} : vector<48x32xbf16>, vector<32x128xbf16>, vector<48x128xf32> -> vector<48x128xf32>
    %13 = arith.addf %7, %12 : vector<48x128xf32>
    %14 = vector.extract_strided_slice %0 {offsets = [2, 0], sizes = [48, 32], strides = [1, 1]} : vector<56x32xf32> to vector<48x32xf32>
    %15 = arith.truncf %14 : vector<48x32xf32> to vector<48x32xbf16>
    %c2 = arith.constant 2 : index
    %c0_8 = arith.constant 0 : index
    %c0_9 = arith.constant 0 : index
    %16 = vector.load %arg1[%c2, %c0_8, %c0_9] : memref<5x32x128xbf16, #tpu.memory_space<vmem>>, vector<1x32x128xbf16>
    %17 = vector.shape_cast %16 : vector<1x32x128xbf16> to vector<32x128xbf16>
    %cst_10 = arith.constant dense<0.000000e+00> : vector<48x128xf32>
    %18 = tpu.matmul %15, %17, %cst_10 {dimension_numbers = #tpu.dot_dimension_numbers<[1], [0], [0], [1], [0, 0, 1, 1], [], []>} : vector<48x32xbf16>, vector<32x128xbf16>, vector<48x128xf32> -> vector<48x128xf32>
    %19 = arith.addf %13, %18 : vector<48x128xf32>
    %20 = vector.extract_strided_slice %0 {offsets = [3, 0], sizes = [48, 32], strides = [1, 1]} : vector<56x32xf32> to vector<48x32xf32>
    %21 = arith.truncf %20 : vector<48x32xf32> to vector<48x32xbf16>
    %c3 = arith.constant 3 : index
    %c0_11 = arith.constant 0 : index
    %c0_12 = arith.constant 0 : index
    %22 = vector.load %arg1[%c3, %c0_11, %c0_12] : memref<5x32x128xbf16, #tpu.memory_space<vmem>>, vector<1x32x128xbf16>
    %23 = vector.shape_cast %22 : vector<1x32x128xbf16> to vector<32x128xbf16>
    %cst_13 = arith.constant dense<0.000000e+00> : vector<48x128xf32>
    %24 = tpu.matmul %21, %23, %cst_13 {dimension_numbers = #tpu.dot_dimension_numbers<[1], [0], [0], [1], [0, 0, 1, 1], [], []>} : vector<48x32xbf16>, vector<32x128xbf16>, vector<48x128xf32> -> vector<48x128xf32>
    %25 = arith.addf %19, %24 : vector<48x128xf32>
    %26 = vector.extract_strided_slice %0 {offsets = [4, 0], sizes = [48, 32], strides = [1, 1]} : vector<56x32xf32> to vector<48x32xf32>
    %27 = arith.truncf %26 : vector<48x32xf32> to vector<48x32xbf16>
    %c4 = arith.constant 4 : index
    %c0_14 = arith.constant 0 : index
    %c0_15 = arith.constant 0 : index
    %28 = vector.load %arg1[%c4, %c0_14, %c0_15] : memref<5x32x128xbf16, #tpu.memory_space<vmem>>, vector<1x32x128xbf16>
    %29 = vector.shape_cast %28 : vector<1x32x128xbf16> to vector<32x128xbf16>
    %cst_16 = arith.constant dense<0.000000e+00> : vector<48x128xf32>
    %30 = tpu.matmul %27, %29, %cst_16 {dimension_numbers = #tpu.dot_dimension_numbers<[1], [0], [0], [1], [0, 0, 1, 1], [], []>} : vector<48x32xbf16>, vector<32x128xbf16>, vector<48x128xf32> -> vector<48x128xf32>
    %31 = arith.addf %25, %30 : vector<48x128xf32>
    %c0_17 = arith.constant 0 : index
    %c0_18 = arith.constant 0 : index
    %32 = vector.load %arg2[%c0_17, %c0_18] : memref<1x128xf32, #tpu.memory_space<vmem>>, vector<1x128xf32>
    %33 = vector.broadcast %32 : vector<1x128xf32> to vector<48x128xf32>
    %34 = arith.addf %31, %33 : vector<48x128xf32>
    %cst_19 = arith.constant 0.000000e+00 : f32
    %35 = vector.broadcast %cst_19 : f32 to vector<48x128xf32>
    %36 = arith.maximumf %34, %35 : vector<48x128xf32>
    %c0_20 = arith.constant 0 : index
    %c0_21 = arith.constant 0 : index
    %37 = vector.load %arg3[%c0_20, %c0_21] : memref<48x128xf32, #tpu.memory_space<vmem>>, vector<48x128xf32>
    %38 = arith.mulf %36, %37 : vector<48x128xf32>
    %39 = vector.extract_strided_slice %38 {offsets = [0, 0], sizes = [24, 128], strides = [1, 1]} : vector<48x128xf32> to vector<24x128xf32>
    %cst_22 = arith.constant dense<0xFF800000> : vector<128xf32>
    %40 = vector.multi_reduction <maximumf>, %39, %cst_22 [0] : vector<24x128xf32> to vector<128xf32>
    %41 = vector.shape_cast %40 : vector<128xf32> to vector<1x128xf32>
    %42 = vector.extract_strided_slice %38 {offsets = [24, 0], sizes = [24, 128], strides = [1, 1]} : vector<48x128xf32> to vector<24x128xf32>
    %cst_23 = arith.constant dense<0xFF800000> : vector<128xf32>
    %43 = vector.multi_reduction <maximumf>, %42, %cst_23 [0] : vector<24x128xf32> to vector<128xf32>
    %44 = vector.shape_cast %43 : vector<128xf32> to vector<1x128xf32>
    %45 = tpu.concatenate %41, %44 in 0 : vector<1x128xf32>, vector<1x128xf32> -> vector<2x128xf32>
    %46 = arith.truncf %45 : vector<2x128xf32> to vector<2x128xbf16>
    %c0_24 = arith.constant 0 : index
    %c0_25 = arith.constant 0 : index
    %47 = vector.load %arg4[%c0_24, %c0_25] : memref<128x128xbf16, #tpu.memory_space<vmem>>, vector<128x128xbf16>
    %cst_26 = arith.constant dense<0.000000e+00> : vector<2x128xf32>
    %48 = tpu.matmul %46, %47, %cst_26 {dimension_numbers = #tpu.dot_dimension_numbers<[1], [0], [0], [1], [0, 0, 1, 1], [], []>} : vector<2x128xbf16>, vector<128x128xbf16>, vector<2x128xf32> -> vector<2x128xf32>
    %c0_27 = arith.constant 0 : index
    %c0_28 = arith.constant 0 : index
    %49 = vector.load %arg5[%c0_27, %c0_28] : memref<1x128xf32, #tpu.memory_space<vmem>>, vector<1x128xf32>
    %50 = vector.broadcast %49 : vector<1x128xf32> to vector<2x128xf32>
    %51 = arith.addf %48, %50 : vector<2x128xf32>
    %c0_29 = arith.constant 0 : index
    %c0_30 = arith.constant 0 : index
    %52 = vector.load %arg6[%c0_29, %c0_30] : memref<2x128xf32, #tpu.memory_space<vmem>>, vector<2x128xf32>
    tpu.vector_store %arg6[%c0_29, %c0_30], %51 {strides = array<i32>} : memref<2x128xf32, #tpu.memory_space<vmem>>, vector<2x128xf32>,
    return
  }
}

</mosaic_0001>

<llo_original>
// kernel: tpu_custom_call.1
$region0: #{tpu_custom_call.1}
  #allocation0 [shape = 'u32[]', space=smem, size = 0x4, offset = 0x4, fixed_abs, tag = 'smem constant byte address 0x4 - core index']
  #allocation1 [shape = 'u32[144,128]{1,0:T(1,128)}', space=vmem, size = 0x12000, scoped, tag = 'internal scratch']
  %s0 = inlined_call_operand.vmem [shape: f32[56,32], index: 0, kind: input, shape index: {}]
  %s1 = inlined_call_operand.vmem [shape: bf16[5,32,128], index: 1, kind: input, shape index: {}]
  %s2 = inlined_call_operand.vmem [shape: f32[1,128], index: 2, kind: input, shape index: {}]
  %s3 = inlined_call_operand.hbm [shape: f32[48,128], index: 3, kind: input, shape index: {}]
  %s4 = inlined_call_operand.hbm [shape: bf16[128,128], index: 4, kind: input, shape index: {}]
  %s5 = inlined_call_operand.vmem [shape: f32[1,128], index: 5, kind: input, shape index: {}]
  %s6 = inlined_call_operand.hbm [shape: f32[2,128], index: 6, kind: output, shape index: {}]
  %s7 = sld [smem:[#allocation0]]
  $region42: #{tpu_custom_call.1} parent=0
    _
  %s9 = ssub.s32 1, %s7
  %s10 = scalar_select 0, %s9, %s7
  $region1: #{tpu_custom_call.1} parent=0
    #allocation2 [shape = 'u8[24576]{0}', space=vmem, size = 0x6000, scoped, tag = 'input window, operand 3, single buffered']
    #allocation3 [shape = 's32[1]{0}', space=sflag, size = 0x4, scoped, tag = 'scoped memory for tpu_custom_call.1']
    #allocation4 [shape = 's32[1]{0}', space=sflag, size = 0x4, scoped, tag = 'scoped memory for tpu_custom_call.1']
    #allocation5 [shape = 'u8[32768]{0}', space=vmem, size = 0x8000, scoped, tag = 'input window, operand 4, single buffered']
    #allocation6 [shape = 's32[1]{0}', space=sflag, size = 0x4, scoped, tag = 'scoped memory for tpu_custom_call.1']
    #allocation7 [shape = 'u8[1024]{0}', space=vmem, size = 0x400, scoped, tag = 'output window, operand 0, single buffered']
    %11 = vsyncpa [#allocation3], 0
    %12 = vsyncpa [#allocation6], 0
    %13 = vsyncpa [#allocation4], 0
    // Predicated region
    $region2: #{tpu_custom_call.1} parent=1 // pred_check
      _
    $region3: #{tpu_custom_call.1} parent=1 // pred_check_branch
      %15 = sbr.rel (0) target = $region5
    $region4: #{tpu_custom_call.1} parent=1 // pred_region
      _
    $region5: #{tpu_custom_call.1} parent=1 // pred_fallthru
      _
    // Predicated region
    $region6: #{tpu_custom_call.1} parent=1 // pred_check
      _
    $region7: #{tpu_custom_call.1} parent=1 // pred_check_branch
      %17 = sbr.rel (0) target = $region9
    $region8: #{tpu_custom_call.1} parent=1 // pred_region
      _
    $region9: #{tpu_custom_call.1} parent=1 // pred_fallthru
      _
    // Predicated region
    $region10: #{tpu_custom_call.1} parent=1 // pred_check
      _
    $region11: #{tpu_custom_call.1} parent=1 // pred_check_branch
      %19 = sbr.rel (0) target = $region13
    $region12: #{tpu_custom_call.1} parent=1 // pred_region
      _
    $region13: #{tpu_custom_call.1} parent=1 // pred_fallthru
      _
    // Predicated region
    $region14: #{tpu_custom_call.1} parent=1 // pred_check
      _
    $region15: #{tpu_custom_call.1} parent=1 // pred_check_branch
      %21 = sbr.rel (0) target = $region17
    $region16: #{tpu_custom_call.1} parent=1 // pred_region
      %s23 = ssub.s32 768, 768
      %24 = vsyncadd [#allocation3], %s23
      %s25 = sshll.u32 [#allocation2], 4
      %s26 = int_to_ptr.vmem [resolvable:$true] %s25
      %31 = dma.hbm_to_vmem [thread:$0]  %s3, 768, %s26, [#allocation3], 128, 128, 8
    $region17: #{tpu_custom_call.1} parent=1 // pred_fallthru
      _
    // Predicated region
    $region18: #{tpu_custom_call.1} parent=1 // pred_check
      _
    $region19: #{tpu_custom_call.1} parent=1 // pred_check_branch
      %33 = sbr.rel (0) target = $region21
    $region20: #{tpu_custom_call.1} parent=1 // pred_region
      %s35 = ssub.s32 1024, 1024
      %36 = vsyncadd [#allocation6], %s35
      %s37 = sshll.u32 [#allocation5], 4
      %s38 = int_to_ptr.vmem [resolvable:$true] %s37
      %43 = dma.hbm_to_vmem [thread:$0]  %s4, 1024, %s38, [#allocation6], 64, 64, 4
    $region21: #{tpu_custom_call.1} parent=1 // pred_fallthru
      _
    // Predicated region
    $region22: #{tpu_custom_call.1} parent=1 // pred_check
      _
    $region23: #{tpu_custom_call.1} parent=1 // pred_check_branch
      %45 = sbr.rel (0) target = $region25
    $region24: #{tpu_custom_call.1} parent=1 // pred_region
      _
    $region25: #{tpu_custom_call.1} parent=1 // pred_fallthru
      _
    // Predicated region
    $region26: #{tpu_custom_call.1} parent=1 // pred_check
      _
    $region27: #{tpu_custom_call.1} parent=1 // pred_check_branch
      %47 = sbr.rel (0) target = $region29
    $region28: #{tpu_custom_call.1} parent=1 // pred_region
      %48 = dma.done [#allocation3], 768
    $region29: #{tpu_custom_call.1} parent=1 // pred_fallthru
      _
    // Predicated region
    $region30: #{tpu_custom_call.1} parent=1 // pred_check
      _
    $region31: #{tpu_custom_call.1} parent=1 // pred_check_branch
      %50 = sbr.rel (0) target = $region33
    $region32: #{tpu_custom_call.1} parent=1 // pred_region
      %51 = dma.done [#allocation6], 1024
    $region33: #{tpu_custom_call.1} parent=1 // pred_fallthru
      _
    %v53 = vld [vmem:[%s0] sm:$0xff]
    %v54 = vld [vmem:[%s0 + $0x8] sm:$0xff]
    %v55 = vld [vmem:[%s0 + $0x10] sm:$0xff]
    %v56 = vld [vmem:[%s0 + $0x18] sm:$0xff]
    %v57 = vld [vmem:[%s0 + $0x20] sm:$0xff]
    %v58 = vld [vmem:[%s0 + $0x28] sm:$0xff]
    %v59 = vld [vmem:[%s0 + $0x30] sm:$0xff]
    %v60 = vpack.c.bf16 %v54, %v53
    %v61 = vpack.c.bf16 %v56, %v55
    %v62 = vpack.c.bf16 %v58, %v57
    %v63 = vld [vmem:[%s1] sm:$0xf]
    %v64 = vld [vmem:[%s1 + $0x4] sm:$0xf]
    %v65 = vld [vmem:[%s1 + $0x8] sm:$0xf]
    %v66 = vld [vmem:[%s1 + $0xc] sm:$0xf]
    %v67 = vpack.c.bf16 %v59, %v59
    %s68 = scalar_lea.vmem %s1, 16
    %v69 = vld [vmem:[%s68] sm:$0xf]
    %v70 = vld [vmem:[%s68 + $0x4] sm:$0xf]
    %v71 = vld [vmem:[%s68 + $0x8] sm:$0xf]
    %v72 = vld [vmem:[%s68 + $0xc] sm:$0xf]
    %vm73 = vsmask.f32 7424
    %v75 = vshrl.u32 %v60, 16
    %v77 = vshll.u32 %v60, 16
    %v79 = vrot.slane %v77, 1
    %v80 = vor.u32 %v75, %v79
    %v82 = vshll.u32 %v61, 16
    %v84 = vrot.slane %v82, 1
    %v85 = vsel %vm73, %v80, %v84
    %v86 = vshrl.u32 %v61, 16
    %v88 = vor.u32 %v86, %v84
    %v90 = vshll.u32 %v62, 16
    %v92 = vrot.slane %v90, 1
    %v93 = vsel %vm73, %v88, %v92
    %v94 = vshrl.u32 %v62, 16
    %v96 = vor.u32 %v94, %v92
    %v98 = vshll.u32 %v67, 16
    %v100 = vrot.slane %v98, 1
    %v101 = vsel %vm73, %v96, %v100
    %v106 = vunpack.c.l.b16 %v69
    %v107 = vunpack.c.l.b16 %v70
    %v108 = vunpack.c.l.b16 %v71
    %v109 = vunpack.c.l.b16 %v72
    %v110 = vpack.c.b16 %v107, %v106
    %v111 = vpack.c.b16 %v109, %v108
    %vm114 = vcmask 261120
    %v116 = vsel %vm114, %v85, 0
    %v119 = vsel %vm114, %v93, 0
    %v122 = vsel %vm114, %v101, 0
    %124 = vmatprep.subr.bf16.mxu0 0
    %125 = vmatpush1.bf16.msra.mxu0 %v110
    %126 = vmatprep.subr.bf16.mxu0 0
    %127 = vmatpush1.bf16.msra.mxu0 %v111
    %128 = vmatprep.subr.bf16.mxu0 0
    %129 = vmatpush1.bf16.msra.mxu0 0
    %130 = vmatprep.subr.bf16.mxu0 0
    %131 = vmatpush1.bf16.msra.mxu0 0
    %132 = vmatprep.subr.bf16.mxu0 0
    %133 = vmatpush1.bf16.msra.mxu0 0
    %134 = vmatprep.subr.bf16.mxu0 0
    %135 = vmatpush1.bf16.msra.mxu0 0
    %136 = vmatprep.subr.bf16.mxu0 0
    %137 = vmatpush1.bf16.msra.mxu0 0
    %138 = vmatprep.subr.bf16.mxu0 0
    %139 = vmatpush1.bf16.msra.mxu0 0
    %140 = vmatprep.subr.bf16.mxu0 0
    %141 = vmatpush1.bf16.msra.mxu0 0
    %142 = vmatprep.subr.bf16.mxu0 0
    %143 = vmatpush1.bf16.msra.mxu0 0
    %144 = vmatprep.subr.bf16.mxu0 0
    %145 = vmatpush1.bf16.msra.mxu0 0
    %146 = vmatprep.subr.bf16.mxu0 0
    %147 = vmatpush1.bf16.msra.mxu0 0
    %148 = vmatprep.subr.bf16.mxu0 0
    %149 = vmatpush1.bf16.msra.mxu0 0
    %150 = vmatprep.subr.bf16.mxu0 0
    %151 = vmatpush1.bf16.msra.mxu0 0
    %152 = vmatprep.subr.bf16.mxu0 0
    %153 = vmatpush1.bf16.msra.mxu0 0
    %154 = vmatprep.subr.bf16.mxu0 0
    %155 = vmatpush1.bf16.msra.mxu0 0
    %156 = vmatprep.mubr.bf16.mxu0 0
    %157 = vmatmul.mubr.bf16.gmra.mrb[0].mxu0 %v116
    %v158 = vpop.f32.mrb[0].mxu0
    %v159 = vadd.f32 0.0, %v158
    %v160 = vpop.f32.mrb[0].mxu0
    %v161 = vpop.f32.mrb[0].mxu0
    %v162 = vadd.f32 0.0, %v161
    %v163 = vpop.f32.mrb[0].mxu0
    %164 = vmatprep.mubr.bf16.mxu0 0
    %165 = vmatmul.mubr.bf16.gmra.mrb[0].mxu0 %v119
    %v166 = vpop.f32.mrb[0].mxu0
    %v167 = vadd.f32 0.0, %v166
    %v168 = vpop.f32.mrb[0].mxu0
    %v169 = vpop.f32.mrb[0].mxu0
    %v170 = vadd.f32 0.0, %v169
    %v171 = vpop.f32.mrb[0].mxu0
    %172 = vmatprep.mubr.bf16.mxu0 0
    %173 = vmatmul.mubr.bf16.gmra.mrb[0].mxu0 %v122
    %v174 = vpop.f32.mrb[0].mxu0
    %v175 = vadd.f32 0.0, %v174
    %v176 = vpop.f32.mrb[0].mxu0
    %v177 = vpop.f32.mrb[0].mxu0
    %v178 = vadd.f32 0.0, %v177
    %v179 = vpop.f32.mrb[0].mxu0
    %180 = vdwg.mxu0
    %v185 = vunpack.c.l.b16 %v63
    %v186 = vunpack.c.l.b16 %v64
    %v187 = vunpack.c.l.b16 %v65
    %v188 = vunpack.c.l.b16 %v66
    %v189 = vpack.c.b16 %v186, %v185
    %v190 = vpack.c.b16 %v188, %v187
    %v193 = vsel %vm114, %v60, 0
    %v195 = vsel %vm114, %v61, 0
    %v197 = vsel %vm114, %v62, 0
    %199 = vmatprep.subr.bf16.mxu0 0
    %200 = vmatpush1.bf16.msra.mxu0 %v189
    %201 = vmatprep.subr.bf16.mxu0 0
    %202 = vmatpush1.bf16.msra.mxu0 %v190
    %203 = vmatprep.subr.bf16.mxu0 0
    %204 = vmatpush1.bf16.msra.mxu0 0
    %205 = vmatprep.subr.bf16.mxu0 0
    %206 = vmatpush1.bf16.msra.mxu0 0
    %207 = vmatprep.subr.bf16.mxu0 0
    %208 = vmatpush1.bf16.msra.mxu0 0
    %209 = vmatprep.subr.bf16.mxu0 0
    %210 = vmatpush1.bf16.msra.mxu0 0
    %211 = vmatprep.subr.bf16.mxu0 0
    %212 = vmatpush1.bf16.msra.mxu0 0
    %213 = vmatprep.subr.bf16.mxu0 0
    %214 = vmatpush1.bf16.msra.mxu0 0
    %215 = vmatprep.subr.bf16.mxu0 0
    %216 = vmatpush1.bf16.msra.mxu0 0
    %217 = vmatprep.subr.bf16.mxu0 0
    %218 = vmatpush1.bf16.msra.mxu0 0
    %219 = vmatprep.subr.bf16.mxu0 0
    %220 = vmatpush1.bf16.msra.mxu0 0
    %221 = vmatprep.subr.bf16.mxu0 0
    %222 = vmatpush1.bf16.msra.mxu0 0
    %223 = vmatprep.subr.bf16.mxu0 0
    %224 = vmatpush1.bf16.msra.mxu0 0
    %225 = vmatprep.subr.bf16.mxu0 0
    %226 = vmatpush1.bf16.msra.mxu0 0
    %227 = vmatprep.subr.bf16.mxu0 0
    %228 = vmatpush1.bf16.msra.mxu0 0
    %229 = vmatprep.subr.bf16.mxu0 0
    %230 = vmatpush1.bf16.msra.mxu0 0
    %231 = vmatprep.mubr.bf16.mxu0 0
    %232 = vmatmul.mubr.bf16.gmra.mrb[0].mxu0 %v193
    %v233 = vpop.f32.mrb[0].mxu0
    %v234 = vadd.f32 %v159, %v233
    %v235 = vpop.f32.mrb[0].mxu0
    %v236 = vpop.f32.mrb[0].mxu0
    %v237 = vadd.f32 %v162, %v236
    %v238 = vpop.f32.mrb[0].mxu0
    %239 = vmatprep.mubr.bf16.mxu0 0
    %240 = vmatmul.mubr.bf16.gmra.mrb[0].mxu0 %v195
    %v241 = vpop.f32.mrb[0].mxu0
    %v242 = vadd.f32 %v167, %v241
    %v243 = vpop.f32.mrb[0].mxu0
    %v244 = vpop.f32.mrb[0].mxu0
    %v245 = vadd.f32 %v170, %v244
    %v246 = vpop.f32.mrb[0].mxu0
    %247 = vmatprep.mubr.bf16.mxu0 0
    %248 = vmatmul.mubr.bf16.gmra.mrb[0].mxu0 %v197
    %v249 = vpop.f32.mrb[0].mxu0
    %v250 = vadd.f32 %v175, %v249
    %v251 = vpop.f32.mrb[0].mxu0
    %v252 = vpop.f32.mrb[0].mxu0
    %v253 = vadd.f32 %v178, %v252
    %v254 = vpop.f32.mrb[0].mxu0
    %255 = vdwg.mxu0
    %s256 = scalar_lea.vmem %s1, 32
    %v257 = vld [vmem:[%s256] sm:$0xf]
    %v258 = vld [vmem:[%s256 + $0x4] sm:$0xf]
    %v259 = vld [vmem:[%s256 + $0x8] sm:$0xf]
    %v260 = vld [vmem:[%s256 + $0xc] sm:$0xf]
    %vm265 = vcmask 1046528
    %v266 = vrot.slane %v60, 1
    %v267 = vrot.slane %v61, 1
    %v268 = vsel %vm265, %v266, %v267
    %v269 = vrot.slane %v62, 1
    %v270 = vsel %vm265, %v267, %v269
    %v271 = vrot.slane %v67, 1
    %v272 = vsel %vm265, %v269, %v271
    %v277 = vunpack.c.l.b16 %v257
    %v278 = vunpack.c.l.b16 %v258
    %v279 = vunpack.c.l.b16 %v259
    %v280 = vunpack.c.l.b16 %v260
    %v281 = vpack.c.b16 %v278, %v277
    %v282 = vpack.c.b16 %v280, %v279
    %v286 = vsel %vm114, %v268, 0
    %v289 = vsel %vm114, %v270, 0
    %v292 = vsel %vm114, %v272, 0
    %294 = vmatprep.subr.bf16.mxu0 0
    %295 = vmatpush1.bf16.msra.mxu0 %v281
    %296 = vmatprep.subr.bf16.mxu0 0
    %297 = vmatpush1.bf16.msra.mxu0 %v282
    %298 = vmatprep.subr.bf16.mxu0 0
    %299 = vmatpush1.bf16.msra.mxu0 0
    %300 = vmatprep.subr.bf16.mxu0 0
    %301 = vmatpush1.bf16.msra.mxu0 0
    %302 = vmatprep.subr.bf16.mxu0 0
    %303 = vmatpush1.bf16.msra.mxu0 0
    %304 = vmatprep.subr.bf16.mxu0 0
    %305 = vmatpush1.bf16.msra.mxu0 0
    %306 = vmatprep.subr.bf16.mxu0 0
    %307 = vmatpush1.bf16.msra.mxu0 0
    %308 = vmatprep.subr.bf16.mxu0 0
    %309 = vmatpush1.bf16.msra.mxu0 0
    %310 = vmatprep.subr.bf16.mxu0 0
    %311 = vmatpush1.bf16.msra.mxu0 0
    %312 = vmatprep.subr.bf16.mxu0 0
    %313 = vmatpush1.bf16.msra.mxu0 0
    %314 = vmatprep.subr.bf16.mxu0 0
    %315 = vmatpush1.bf16.msra.mxu0 0
    %316 = vmatprep.subr.bf16.mxu0 0
    %317 = vmatpush1.bf16.msra.mxu0 0
    %318 = vmatprep.subr.bf16.mxu0 0
    %319 = vmatpush1.bf16.msra.mxu0 0
    %320 = vmatprep.subr.bf16.mxu0 0
    %321 = vmatpush1.bf16.msra.mxu0 0
    %322 = vmatprep.subr.bf16.mxu0 0
    %323 = vmatpush1.bf16.msra.mxu0 0
    %324 = vmatprep.subr.bf16.mxu0 0
    %325 = vmatpush1.bf16.msra.mxu0 0
    %326 = vmatprep.mubr.bf16.mxu0 0
    %327 = vmatmul.mubr.bf16.gmra.mrb[0].mxu0 %v286
    %v328 = vpop.f32.mrb[0].mxu0
    %v329 = vadd.f32 0.0, %v328
    %v330 = vpop.f32.mrb[0].mxu0
    %v331 = vpop.f32.mrb[0].mxu0
    %v332 = vadd.f32 0.0, %v331
    %v333 = vpop.f32.mrb[0].mxu0
    %334 = vmatprep.mubr.bf16.mxu0 0
    %335 = vmatmul.mubr.bf16.gmra.mrb[0].mxu0 %v289
    %v336 = vpop.f32.mrb[0].mxu0
    %v337 = vadd.f32 0.0, %v336
    %v338 = vpop.f32.mrb[0].mxu0
    %v339 = vpop.f32.mrb[0].mxu0
    %v340 = vadd.f32 0.0, %v339
    %v341 = vpop.f32.mrb[0].mxu0
    %342 = vmatprep.mubr.bf16.mxu0 0
    %343 = vmatmul.mubr.bf16.gmra.mrb[0].mxu0 %v292
    %v344 = vpop.f32.mrb[0].mxu0
    %v345 = vadd.f32 0.0, %v344
    %v346 = vpop.f32.mrb[0].mxu0
    %v347 = vpop.f32.mrb[0].mxu0
    %v348 = vadd.f32 0.0, %v347
    %v349 = vpop.f32.mrb[0].mxu0
    %350 = vdwg.mxu0
    %v351 = vadd.f32 %v234, %v329
    %v352 = vadd.f32 %v237, %v332
    %v353 = vadd.f32 %v242, %v337
    %v354 = vadd.f32 %v245, %v340
    %v355 = vadd.f32 %v250, %v345
    %v356 = vadd.f32 %v253, %v348
    %s357 = scalar_lea.vmem %s1, 48
    %v358 = vld [vmem:[%s357] sm:$0xf]
    %v359 = vld [vmem:[%s357 + $0x4] sm:$0xf]
    %v360 = vld [vmem:[%s357 + $0x8] sm:$0xf]
    %v361 = vld [vmem:[%s357 + $0xc] sm:$0xf]
    %vm362 = vsmask.f32 6400
    %v363 = vrot.slane %v75, 1
    %v364 = vrot.slane %v77, 2
    %v365 = vor.u32 %v363, %v364
    %v366 = vrot.slane %v86, 1
    %v367 = vrot.slane %v82, 2
    %v368 = vor.u32 %v366, %v367
    %v369 = vsel %vm362, %v365, %v368
    %v370 = vrot.slane %v94, 1
    %v371 = vrot.slane %v90, 2
    %v372 = vor.u32 %v370, %v371
    %v373 = vsel %vm362, %v368, %v372
    %v374 = vshrl.u32 %v67, 16
    %v376 = vrot.slane %v374, 1
    %v377 = vrot.slane %v98, 2
    %v378 = vor.u32 %v376, %v377
    %v379 = vsel %vm362, %v372, %v378
    %v384 = vunpack.c.l.b16 %v358
    %v385 = vunpack.c.l.b16 %v359
    %v386 = vunpack.c.l.b16 %v360
    %v387 = vunpack.c.l.b16 %v361
    %v388 = vpack.c.b16 %v385, %v384
    %v389 = vpack.c.b16 %v387, %v386
    %v393 = vsel %vm114, %v369, 0
    %v396 = vsel %vm114, %v373, 0
    %v399 = vsel %vm114, %v379, 0
    %401 = vmatprep.subr.bf16.mxu0 0
    %402 = vmatpush1.bf16.msra.mxu0 %v388
    %403 = vmatprep.subr.bf16.mxu0 0
    %404 = vmatpush1.bf16.msra.mxu0 %v389
    %405 = vmatprep.subr.bf16.mxu0 0
    %406 = vmatpush1.bf16.msra.mxu0 0
    %407 = vmatprep.subr.bf16.mxu0 0
    %408 = vmatpush1.bf16.msra.mxu0 0
    %409 = vmatprep.subr.bf16.mxu0 0
    %410 = vmatpush1.bf16.msra.mxu0 0
    %411 = vmatprep.subr.bf16.mxu0 0
    %412 = vmatpush1.bf16.msra.mxu0 0
    %413 = vmatprep.subr.bf16.mxu0 0
    %414 = vmatpush1.bf16.msra.mxu0 0
    %415 = vmatprep.subr.bf16.mxu0 0
    %416 = vmatpush1.bf16.msra.mxu0 0
    %417 = vmatprep.subr.bf16.mxu0 0
    %418 = vmatpush1.bf16.msra.mxu0 0
    %419 = vmatprep.subr.bf16.mxu0 0
    %420 = vmatpush1.bf16.msra.mxu0 0
    %421 = vmatprep.subr.bf16.mxu0 0
    %422 = vmatpush1.bf16.msra.mxu0 0
    %423 = vmatprep.subr.bf16.mxu0 0
    %424 = vmatpush1.bf16.msra.mxu0 0
    %425 = vmatprep.subr.bf16.mxu0 0
    %426 = vmatpush1.bf16.msra.mxu0 0
    %427 = vmatprep.subr.bf16.mxu0 0
    %428 = vmatpush1.bf16.msra.mxu0 0
    %429 = vmatprep.subr.bf16.mxu0 0
    %430 = vmatpush1.bf16.msra.mxu0 0
    %431 = vmatprep.subr.bf16.mxu0 0
    %432 = vmatpush1.bf16.msra.mxu0 0
    %433 = vmatprep.mubr.bf16.mxu0 0
    %434 = vmatmul.mubr.bf16.gmra.mrb[0].mxu0 %v393
    %v435 = vpop.f32.mrb[0].mxu0
    %v436 = vadd.f32 0.0, %v435
    %v437 = vpop.f32.mrb[0].mxu0
    %v438 = vpop.f32.mrb[0].mxu0
    %v439 = vadd.f32 0.0, %v438
    %v440 = vpop.f32.mrb[0].mxu0
    %441 = vmatprep.mubr.bf16.mxu0 0
    %442 = vmatmul.mubr.bf16.gmra.mrb[0].mxu0 %v396
    %v443 = vpop.f32.mrb[0].mxu0
    %v444 = vadd.f32 0.0, %v443
    %v445 = vpop.f32.mrb[0].mxu0
    %v446 = vpop.f32.mrb[0].mxu0
    %v447 = vadd.f32 0.0, %v446
    %v448 = vpop.f32.mrb[0].mxu0
    %449 = vmatprep.mubr.bf16.mxu0 0
    %450 = vmatmul.mubr.bf16.gmra.mrb[0].mxu0 %v399
    %v451 = vpop.f32.mrb[0].mxu0
    %v452 = vadd.f32 0.0, %v451
    %v453 = vpop.f32.mrb[0].mxu0
    %v454 = vpop.f32.mrb[0].mxu0
    %v455 = vadd.f32 0.0, %v454
    %v456 = vpop.f32.mrb[0].mxu0
    %457 = vdwg.mxu0
    %v458 = vadd.f32 %v351, %v436
    %v459 = vadd.f32 %v352, %v439
    %v460 = vadd.f32 %v353, %v444
    %v461 = vadd.f32 %v354, %v447
    %v462 = vadd.f32 %v355, %v452
    %v463 = vadd.f32 %v356, %v455
    %s464 = scalar_lea.vmem %s1, 64
    %v465 = vld [vmem:[%s464] sm:$0xf]
    %v466 = vld [vmem:[%s464 + $0x4] sm:$0xf]
    %v467 = vld [vmem:[%s464 + $0x8] sm:$0xf]
    %v468 = vld [vmem:[%s464 + $0xc] sm:$0xf]
    %vm469 = vcmask 1045504
    %v470 = vrot.slane %v60, 2
    %v471 = vrot.slane %v61, 2
    %v472 = vsel %vm469, %v470, %v471
    %v473 = vrot.slane %v62, 2
    %v474 = vsel %vm469, %v471, %v473
    %v475 = vrot.slane %v67, 2
    %v476 = vsel %vm469, %v473, %v475
    %v481 = vunpack.c.l.b16 %v465
    %v482 = vunpack.c.l.b16 %v466
    %v483 = vunpack.c.l.b16 %v467
    %v484 = vunpack.c.l.b16 %v468
    %v485 = vpack.c.b16 %v482, %v481
    %v486 = vpack.c.b16 %v484, %v483
    %v490 = vsel %vm114, %v472, 0
    %v493 = vsel %vm114, %v474, 0
    %v496 = vsel %vm114, %v476, 0
    %498 = vmatprep.subr.bf16.mxu0 0
    %499 = vmatpush1.bf16.msra.mxu0 %v485
    %500 = vmatprep.subr.bf16.mxu0 0
    %501 = vmatpush1.bf16.msra.mxu0 %v486
    %502 = vmatprep.subr.bf16.mxu0 0
    %503 = vmatpush1.bf16.msra.mxu0 0
    %504 = vmatprep.subr.bf16.mxu0 0
    %505 = vmatpush1.bf16.msra.mxu0 0
    %506 = vmatprep.subr.bf16.mxu0 0
    %507 = vmatpush1.bf16.msra.mxu0 0
    %508 = vmatprep.subr.bf16.mxu0 0
    %509 = vmatpush1.bf16.msra.mxu0 0
    %510 = vmatprep.subr.bf16.mxu0 0
    %511 = vmatpush1.bf16.msra.mxu0 0
    %512 = vmatprep.subr.bf16.mxu0 0
    %513 = vmatpush1.bf16.msra.mxu0 0
    %514 = vmatprep.subr.bf16.mxu0 0
    %515 = vmatpush1.bf16.msra.mxu0 0
    %516 = vmatprep.subr.bf16.mxu0 0
    %517 = vmatpush1.bf16.msra.mxu0 0
    %518 = vmatprep.subr.bf16.mxu0 0
    %519 = vmatpush1.bf16.msra.mxu0 0
    %520 = vmatprep.subr.bf16.mxu0 0
    %521 = vmatpush1.bf16.msra.mxu0 0
    %522 = vmatprep.subr.bf16.mxu0 0
    %523 = vmatpush1.bf16.msra.mxu0 0
    %524 = vmatprep.subr.bf16.mxu0 0
    %525 = vmatpush1.bf16.msra.mxu0 0
    %526 = vmatprep.subr.bf16.mxu0 0
    %527 = vmatpush1.bf16.msra.mxu0 0
    %528 = vmatprep.subr.bf16.mxu0 0
    %529 = vmatpush1.bf16.msra.mxu0 0
    %530 = vmatprep.mubr.bf16.mxu0 0
    %531 = vmatmul.mubr.bf16.gmra.mrb[0].mxu0 %v490
    %v532 = vpop.f32.mrb[0].mxu0
    %v533 = vadd.f32 0.0, %v532
    %v534 = vpop.f32.mrb[0].mxu0
    %v535 = vpop.f32.mrb[0].mxu0
    %v536 = vadd.f32 0.0, %v535
    %v537 = vpop.f32.mrb[0].mxu0
    %538 = vmatprep.mubr.bf16.mxu0 0
    %539 = vmatmul.mubr.bf16.gmra.mrb[0].mxu0 %v493
    %v540 = vpop.f32.mrb[0].mxu0
    %v541 = vadd.f32 0.0, %v540
    %v542 = vpop.f32.mrb[0].mxu0
    %v543 = vpop.f32.mrb[0].mxu0
    %v544 = vadd.f32 0.0, %v543
    %v545 = vpop.f32.mrb[0].mxu0
    %546 = vmatprep.mubr.bf16.mxu0 0
    %547 = vmatmul.mubr.bf16.gmra.mrb[0].mxu0 %v496
    %v548 = vpop.f32.mrb[0].mxu0
    %v549 = vadd.f32 0.0, %v548
    %v550 = vpop.f32.mrb[0].mxu0
    %v551 = vpop.f32.mrb[0].mxu0
    %v552 = vadd.f32 0.0, %v551
    %v553 = vpop.f32.mrb[0].mxu0
    %554 = vdwg.mxu0
    %v555 = vadd.f32 %v458, %v533
    %v556 = vadd.f32 %v459, %v536
    %v557 = vadd.f32 %v460, %v541
    %v558 = vadd.f32 %v461, %v544
    %v559 = vadd.f32 %v462, %v549
    %v560 = vadd.f32 %v463, %v552
    %v561 = vld [vmem:[%s2] sm:$0x1]
    %v563 = vlaneseq
    %v564 = vshrl.u32 %v563, 7
    %v565 = vsub.s32 0, %v564
    %v566 = vrot.slane %v561, %v565
    %v568 = vadd.f32 %v555, %v566
    %v569 = vadd.f32 %v556, %v566
    %v570 = vadd.f32 %v557, %v566
    %v571 = vadd.f32 %v558, %v566
    %v572 = vadd.f32 %v559, %v566
    %v573 = vadd.f32 %v560, %v566
    %v574 = vmax.f32 %v568, 0.0
    %v575 = vmax.f32 %v569, 0.0
    %v576 = vmax.f32 %v570, 0.0
    %v577 = vmax.f32 %v571, 0.0
    %v578 = vmax.f32 %v572, 0.0
    %v579 = vmax.f32 %v573, 0.0
    %v580 = vld [vmem:[#allocation2] sm:$0xff]
    %v581 = vld [vmem:[#allocation2 + $0x8] sm:$0xff]
    %v582 = vld [vmem:[#allocation2 + $0x10] sm:$0xff]
    %v583 = vld [vmem:[#allocation2 + $0x18] sm:$0xff]
    %v584 = vld [vmem:[#allocation2 + $0x20] sm:$0xff]
    %v585 = vld [vmem:[#allocation2 + $0x28] sm:$0xff]
    %v586 = vmul.f32 %v574, %v580
    %v587 = vmul.f32 %v575, %v581
    %v588 = vmul.f32 %v576, %v582
    %v589 = vmul.f32 %v577, %v583
    %v590 = vmul.f32 %v578, %v584
    %v591 = vmul.f32 %v579, %v585
    %v592 = vmax.f32 %v586, %v587
    %v593 = vmax.f32 %v592, %v588
    %v594 = vrot.slane %v593, 4
    %v595 = vmax.f32 %v593, %v594
    %v596 = vrot.slane %v595, 2
    %v597 = vmax.f32 %v595, %v596
    %v598 = vrot.slane %v597, 1
    %v599 = vmax.f32 %v597, %v598
    %v600 = vmax.f32 %v589, %v590
    %v601 = vmax.f32 %v600, %v591
    %v602 = vrot.slane %v601, 4
    %v603 = vmax.f32 %v601, %v602
    %v604 = vrot.slane %v603, 2
    %v605 = vmax.f32 %v603, %v604
    %v606 = vrot.slane %v605, 1
    %v607 = vmax.f32 %v605, %v606
    %vm608 = vcmask 1040384
    %v609 = vsel %vm608, %v599, %v607
    %v610 = vpack.c.bf16 %v609, %v609
    %v611 = vld [vmem:[#allocation5] sm:$0xf]
    %v612 = vld [vmem:[#allocation5 + $0x4] sm:$0xf]
    %v613 = vld [vmem:[#allocation5 + $0x8] sm:$0xf]
    %v614 = vld [vmem:[#allocation5 + $0xc] sm:$0xf]
    %v615 = vld [vmem:[#allocation5 + $0x10] sm:$0xf]
    %v616 = vld [vmem:[#allocation5 + $0x14] sm:$0xf]
    %v617 = vld [vmem:[#allocation5 + $0x18] sm:$0xf]
    %v618 = vld [vmem:[#allocation5 + $0x1c] sm:$0xf]
    %v619 = vld [vmem:[#allocation5 + $0x20] sm:$0xf]
    %v620 = vld [vmem:[#allocation5 + $0x24] sm:$0xf]
    %v621 = vld [vmem:[#allocation5 + $0x28] sm:$0xf]
    %v622 = vld [vmem:[#allocation5 + $0x2c] sm:$0xf]
    %v623 = vld [vmem:[#allocation5 + $0x30] sm:$0xf]
    %v624 = vld [vmem:[#allocation5 + $0x34] sm:$0xf]
    %v625 = vld [vmem:[#allocation5 + $0x38] sm:$0xf]
    %v626 = vld [vmem:[#allocation5 + $0x3c] sm:$0xf]
    %v627 = vld [vmem:[%s5] sm:$0x1]
    %v629 = vlaneseq
    %v630 = vshrl.u32 %v629, 7
    %v631 = vsub.s32 0, %v630
    %v632 = vrot.slane %v627, %v631
    %v650 = vunpack.c.l.b16 %v611
    %v651 = vunpack.c.l.b16 %v612
    %v652 = vunpack.c.l.b16 %v613
    %v653 = vunpack.c.l.b16 %v614
    %v654 = vunpack.c.l.b16 %v615
    %v655 = vunpack.c.l.b16 %v616
    %v656 = vunpack.c.l.b16 %v617
    %v657 = vunpack.c.l.b16 %v618
    %v658 = vunpack.c.l.b16 %v619
    %v659 = vunpack.c.l.b16 %v620
    %v660 = vunpack.c.l.b16 %v621
    %v661 = vunpack.c.l.b16 %v622
    %v662 = vunpack.c.l.b16 %v623
    %v663 = vunpack.c.l.b16 %v624
    %v664 = vunpack.c.l.b16 %v625
    %v665 = vunpack.c.l.b16 %v626
    %v666 = vpack.c.b16 %v651, %v650
    %v667 = vpack.c.b16 %v653, %v652
    %v668 = vpack.c.b16 %v655, %v654
    %v669 = vpack.c.b16 %v657, %v656
    %v670 = vpack.c.b16 %v659, %v658
    %v671 = vpack.c.b16 %v661, %v660
    %v672 = vpack.c.b16 %v663, %v662
    %v673 = vpack.c.b16 %v665, %v664
    %682 = vmatprep.subr.bf16.mxu0 0
    %683 = vmatpush1.bf16.msra.mxu0 %v666
    %684 = vmatprep.subr.bf16.mxu0 0
    %685 = vmatpush1.bf16.msra.mxu0 %v667
    %686 = vmatprep.subr.bf16.mxu0 0
    %687 = vmatpush1.bf16.msra.mxu0 %v668
    %688 = vmatprep.subr.bf16.mxu0 0
    %689 = vmatpush1.bf16.msra.mxu0 %v669
    %690 = vmatprep.subr.bf16.mxu0 0
    %691 = vmatpush1.bf16.msra.mxu0 %v670
    %692 = vmatprep.subr.bf16.mxu0 0
    %693 = vmatpush1.bf16.msra.mxu0 %v671
    %694 = vmatprep.subr.bf16.mxu0 0
    %695 = vmatpush1.bf16.msra.mxu0 %v672
    %696 = vmatprep.subr.bf16.mxu0 0
    %697 = vmatpush1.bf16.msra.mxu0 %v673
    %698 = vmatprep.subr.bf16.mxu0 0
    %699 = vmatpush1.bf16.msra.mxu0 0
    %700 = vmatprep.subr.bf16.mxu0 0
    %701 = vmatpush1.bf16.msra.mxu0 0
    %702 = vmatprep.subr.bf16.mxu0 0
    %703 = vmatpush1.bf16.msra.mxu0 0
    %704 = vmatprep.subr.bf16.mxu0 0
    %705 = vmatpush1.bf16.msra.mxu0 0
    %706 = vmatprep.subr.bf16.mxu0 0
    %707 = vmatpush1.bf16.msra.mxu0 0
    %708 = vmatprep.subr.bf16.mxu0 0
    %709 = vmatpush1.bf16.msra.mxu0 0
    %710 = vmatprep.subr.bf16.mxu0 0
    %711 = vmatpush1.bf16.msra.mxu0 0
    %712 = vmatprep.subr.bf16.mxu0 0
    %713 = vmatpush1.bf16.msra.mxu0 0
    %714 = vmatprep.mubr.bf16.mxu0 0
    %715 = vmatmul.mubr.bf16.gmra.mrb[0].mxu0 %v610
    %v716 = vpop.f32.mrb[0].mxu0
    %v717 = vadd.f32 %v632, %v716
    %v718 = vpop.f32.mrb[0].mxu0
    %v719 = vpop.f32.mrb[0].mxu0
    %v720 = vpop.f32.mrb[0].mxu0
    %721 = vdwg.mxu0
    %722 = vst [vmem:[#allocation7] sm:$0x3] %v717
    // Predicated region
    $region34: #{tpu_custom_call.1} parent=1 // pred_check
      _
    $region35: #{tpu_custom_call.1} parent=1 // pred_check_branch
      %724 = sbr.rel (0) target = $region37
    $region36: #{tpu_custom_call.1} parent=1 // pred_region
      %s726 = ssub.s32 32, 32
      %727 = vsyncadd [#allocation4], %s726
      %s729 = sshll.u32 [#allocation7], 4
      %s730 = int_to_ptr.vmem [resolvable:$true] %s729
      %732 = dma.vmem_to_hbm [thread:$0]  %s730, 32, %s6, [#allocation4]
    $region37: #{tpu_custom_call.1} parent=1 // pred_fallthru
      _
    // Predicated region
    $region38: #{tpu_custom_call.1} parent=1 // pred_check
      _
    $region39: #{tpu_custom_call.1} parent=1 // pred_check_branch
      %734 = sbr.rel (0) target = $region41
    $region40: #{tpu_custom_call.1} parent=1 // pred_region
      %735 = dma.done [#allocation4], 32
    $region41: #{tpu_custom_call.1} parent=1 // pred_fallthru
      _
    %736 = vsyncpa [#allocation3], 1
    %737 = vsyncpa [#allocation6], 1
    %738 = vsyncpa [#allocation4], 1

</llo_original>
